<compile_context>
chip_gen: v7x
topology: tpu7x:2x2x1
jax: 0.10.0
libtpu: 0.0.40
codegen_flags: <defaults>
</compile_context>

<pallas_src>
import jax
import jax.numpy as jnp
from jax.experimental import pallas as pl
from jax.experimental.pallas import tpu as pltpu


_LANE = 128
_PAD_BIAS = -1e30  # padded-class bias: exp(pad - max) == 0 -> never affects the softmax


def _round_up(x, m):
    return ((x + m - 1) // m) * m


def _ensemble_kernel(x_ref, w_ref, b_ref, o_ref):
    # x_ref: (tb, D) f32   w_ref: (D, L*Cp) bf16   b_ref: (1, L*Cp) f32
    # o_ref: (tb, Cp) f32  (lane-dense: Cp is a multiple of 128)
    c_pad = o_ref.shape[-1]
    n_learners = b_ref.shape[-1] // c_pad

    # In-kernel cast: avoids a separate wrapper-side XLA pass over x.
    xb = x_ref[...].astype(w_ref.dtype)

    acc = jnp.zeros(o_ref.shape, jnp.float32)
    for l in range(n_learners):                    # static unroll (L is trace-time const)
        lo = l * c_pad                             # 128-aligned lane slice of resident W
        z = jnp.dot(xb, w_ref[:, lo:lo + c_pad],
                    preferred_element_type=jnp.float32)        # (tb, Cp) f32
        z = z + b_ref[:, lo:lo + c_pad]
        m = jnp.max(z, axis=1, keepdims=True)
        e = jnp.exp(z - m)                         # padded lanes -> exp(-1e30 - m) == 0
        denom = jnp.sum(e, axis=1, keepdims=True)
        acc = acc + e * pl.reciprocal(denom, approx=True)       # EUP slot, ~free
    o_ref[...] = acc


def pack_learners(W, b, *, compute_dtype=jnp.bfloat16):
    """Fuse/pad (L, D, C) learner weights into one lane-dense (D, L*Cp) weight.

    Call ONCE at weight-load time (not per forward) so the repack/cast cost and its
    HBM traffic are not paid on every inference call.
    """
    L, D, C = W.shape
    assert b.shape == (L, C)
    Cp = _round_up(C, _LANE)
    Wp = jnp.pad(W, ((0, 0), (0, 0), (0, Cp - C)))                    # zero pad columns
    bp = jnp.pad(b, ((0, 0), (0, Cp - C)), constant_values=_PAD_BIAS)  # -inf-ish pad bias
    Wf = jnp.transpose(Wp, (1, 0, 2)).reshape(D, L * Cp).astype(compute_dtype)
    bf = bp.reshape(1, L * Cp).astype(jnp.float32)
    return Wf, bf, (L, D, C, Cp)


def multi_learners_forward(x, Wf, bf, meta, *, block_b=256):
    """x: (B, D) f32, packed (Wf, bf, meta) from pack_learners -> (B, C) f32."""
    L, D, C, Cp = meta
    B, D2 = x.shape
    assert D2 == D
    x = x.astype(jnp.float32)   # stays f32 in HBM; bf16 cast happens inside the kernel

    if B <= block_b:
        tb = B                        # single full-batch block (any B is legal)
    else:
        tb = max(8, (block_b // 8) * 8)   # sublane-aligned batch tile
    grid_b = pl.cdiv(B, tb)           # ragged tail masked by Pallas -- no jnp.pad of x

    # VMEM budget: x (f32, double-buffered) + out (f32, double-buffered)
    #              + resident W/bias (worst case 2 buffers) + headroom.
    itemsize_w = jnp.dtype(Wf.dtype).itemsize
    vmem_est = (2 * tb * D * 4 + 2 * tb * Cp * 4
                + 2 * D * L * Cp * itemsize_w + 2 * L * Cp * 4 + (8 << 20))
    vmem_limit = int(max(32 << 20, min(_round_up(vmem_est, 1 << 20), 96 << 20)))

    out = pl.pallas_call(
        _ensemble_kernel,
        out_shape=jax.ShapeDtypeStruct((B, Cp), jnp.float32),
        grid_spec=pltpu.PrefetchScalarGridSpec(
            num_scalar_prefetch=0,
            grid=(grid_b,),
            in_specs=[
                pl.BlockSpec((tb, D), lambda i: (i, 0)),       # x batch tile (f32)
                pl.BlockSpec((D, L * Cp), lambda i: (0, 0)),   # fused W, VMEM-resident
                pl.BlockSpec((1, L * Cp), lambda i: (0, 0)),   # fused bias, resident
            ],
            out_specs=pl.BlockSpec((tb, Cp), lambda i: (i, 0)),  # lane-dense output
        ),
        compiler_params=pltpu.CompilerParams(
            dimension_semantics=("parallel",),
            vmem_limit_bytes=vmem_limit,
        ),
    )(x, Wf, bf)
    return out[:, :C]


def reference_forward(x, W, b):
    # Pure-JAX reference of the PyTorch forward (hyperparameters=None), in f32.
    y = 0.0
    for l in range(W.shape[0]):
        y = y + jax.nn.softmax(x @ W[l] + b[l], axis=1)
    return y


if __name__ == "__main__":
    key = jax.random.PRNGKey(0)
    n_learners, B, D, C = 3, 8, 32, 16

    kx, kw, kb, kx2 = jax.random.split(key, 4)
    x = jax.random.normal(kx, (B, D), dtype=jnp.float32)
    # Deterministic synthetic parameters for each learner (no checkpoint load).
    W = jax.random.normal(kw, (n_learners, D, C), dtype=jnp.float32) * 0.1
    b = jax.random.normal(kb, (n_learners, C), dtype=jnp.float32) * 0.01

    # Pack once at "weight-load" time.
    Wf, bf, meta = pack_learners(W, b)

    # Small single-block case.
    y = jax.block_until_ready(multi_learners_forward(x, Wf, bf, meta))
    y_ref = reference_forward(x, W, b)
    assert y.shape == (B, C)
    # bf16 x/W (f32 accumulation) + approx reciprocal => small deltas vs f32 reference.
    assert jnp.allclose(y, y_ref, atol=1e-2, rtol=1e-2), "mismatch vs reference"
    # Each ensemble row should sum to ~n_learners (each softmax sums to ~1).
    assert jnp.allclose(y.sum(axis=1), float(n_learners), atol=1e-2), "row-sum check"

    # Exercise the tiled + ragged-tail path (B not a multiple of the batch tile).
    B2 = 200
    x2 = jax.random.normal(kx2, (B2, D), dtype=jnp.float32)
    y2 = jax.block_until_ready(multi_learners_forward(x2, Wf, bf, meta, block_b=128))
    y2_ref = reference_forward(x2, W, b)
    assert y2.shape == (B2, C)
    assert jnp.allclose(y2, y2_ref, atol=1e-2, rtol=1e-2), "ragged-tail mismatch"

    print("KERNEL_OK")
</pallas_src>

<mosaic_0001>
module attributes {stable_mosaic.version = 11 : i64} {
  func.func @_ensemble_kernel(%arg0: i32, %arg1: memref<8x32xf32, #tpu.memory_space<vmem>>, %arg2: memref<32x384xbf16, #tpu.memory_space<vmem>>, %arg3: memref<1x384xf32, #tpu.memory_space<vmem>>, %arg4: memref<8x128xf32, #tpu.memory_space<vmem>>) attributes {dimension_semantics = [#tpu.dimension_semantics<parallel>], iteration_bounds = array<i64: 1>, scalar_prefetch = 0 : i64, scratch_operands = 0 : i64, tpu.core_type = #tpu.core_type<tc>, window_params = [{transform_indices = @transform_0, window_bounds = array<i64: 8, 32>}, {pipeline_mode = #tpu.pipeline_mode<synchronous>, transform_indices = @transform_1, window_bounds = array<i64: 32, 384>}, {pipeline_mode = #tpu.pipeline_mode<synchronous>, transform_indices = @transform_2, window_bounds = array<i64: 1, 384>}, {transform_indices = @transform_3, window_bounds = array<i64: 8, 128>}]} {
    %c0 = arith.constant 0 : index
    %c0_0 = arith.constant 0 : index
    %0 = vector.load %arg1[%c0, %c0_0] : memref<8x32xf32, #tpu.memory_space<vmem>>, vector<8x32xf32>
    %1 = arith.truncf %0 : vector<8x32xf32> to vector<8x32xbf16>
    %cst = arith.constant 0.000000e+00 : f32
    %2 = vector.broadcast %cst : f32 to vector<8x128xf32>
    %c0_1 = arith.constant 0 : index
    %c0_2 = arith.constant 0 : index
    %3 = vector.load %arg2[%c0_1, %c0_2] : memref<32x384xbf16, #tpu.memory_space<vmem>>, vector<32x128xbf16>
    %cst_3 = arith.constant dense<0.000000e+00> : vector<8x128xf32>
    %4 = tpu.matmul %1, %3, %cst_3 {dimension_numbers = #tpu.dot_dimension_numbers<[1], [0], [0], [1], [0, 0, 1, 1], [], []>} : vector<8x32xbf16>, vector<32x128xbf16>, vector<8x128xf32> -> vector<8x128xf32>
    %c0_4 = arith.constant 0 : index
    %c0_5 = arith.constant 0 : index
    %5 = vector.load %arg3[%c0_4, %c0_5] : memref<1x384xf32, #tpu.memory_space<vmem>>, vector<1x128xf32>
    %6 = vector.broadcast %5 : vector<1x128xf32> to vector<8x128xf32>
    %7 = arith.addf %4, %6 : vector<8x128xf32>
    %cst_6 = arith.constant dense<0xFF800000> : vector<8xf32>
    %8 = vector.multi_reduction <maximumf>, %7, %cst_6 [1] : vector<8x128xf32> to vector<8xf32>
    %9 = vector.shape_cast %8 : vector<8xf32> to vector<8x1xf32>
    %10 = vector.broadcast %9 : vector<8x1xf32> to vector<8x128xf32>
    %11 = arith.subf %7, %10 : vector<8x128xf32>
    %12 = math.exp %11 : vector<8x128xf32>
    %cst_7 = arith.constant dense<0.000000e+00> : vector<8xf32>
    %13 = vector.multi_reduction <add>, %12, %cst_7 [1] : vector<8x128xf32> to vector<8xf32>
    %14 = vector.shape_cast %13 : vector<8xf32> to vector<8x1xf32>
    %15 = tpu.reciprocal %14 {approx = true} : vector<8x1xf32> -> vector<8x1xf32>
    %16 = vector.broadcast %15 : vector<8x1xf32> to vector<8x128xf32>
    %17 = arith.mulf %12, %16 : vector<8x128xf32>
    %18 = arith.addf %2, %17 : vector<8x128xf32>
    %c0_8 = arith.constant 0 : index
    %c128 = arith.constant 128 : index
    %19 = vector.load %arg2[%c0_8, %c128] : memref<32x384xbf16, #tpu.memory_space<vmem>>, vector<32x128xbf16>
    %cst_9 = arith.constant dense<0.000000e+00> : vector<8x128xf32>
    %20 = tpu.matmul %1, %19, %cst_9 {dimension_numbers = #tpu.dot_dimension_numbers<[1], [0], [0], [1], [0, 0, 1, 1], [], []>} : vector<8x32xbf16>, vector<32x128xbf16>, vector<8x128xf32> -> vector<8x128xf32>
    %c0_10 = arith.constant 0 : index
    %c128_11 = arith.constant 128 : index
    %21 = vector.load %arg3[%c0_10, %c128_11] : memref<1x384xf32, #tpu.memory_space<vmem>>, vector<1x128xf32>
    %22 = vector.broadcast %21 : vector<1x128xf32> to vector<8x128xf32>
    %23 = arith.addf %20, %22 : vector<8x128xf32>
    %cst_12 = arith.constant dense<0xFF800000> : vector<8xf32>
    %24 = vector.multi_reduction <maximumf>, %23, %cst_12 [1] : vector<8x128xf32> to vector<8xf32>
    %25 = vector.shape_cast %24 : vector<8xf32> to vector<8x1xf32>
    %26 = vector.broadcast %25 : vector<8x1xf32> to vector<8x128xf32>
    %27 = arith.subf %23, %26 : vector<8x128xf32>
    %28 = math.exp %27 : vector<8x128xf32>
    %cst_13 = arith.constant dense<0.000000e+00> : vector<8xf32>
    %29 = vector.multi_reduction <add>, %28, %cst_13 [1] : vector<8x128xf32> to vector<8xf32>
    %30 = vector.shape_cast %29 : vector<8xf32> to vector<8x1xf32>
    %31 = tpu.reciprocal %30 {approx = true} : vector<8x1xf32> -> vector<8x1xf32>
    %32 = vector.broadcast %31 : vector<8x1xf32> to vector<8x128xf32>
    %33 = arith.mulf %28, %32 : vector<8x128xf32>
    %34 = arith.addf %18, %33 : vector<8x128xf32>
    %c0_14 = arith.constant 0 : index
    %c256 = arith.constant 256 : index
    %35 = vector.load %arg2[%c0_14, %c256] : memref<32x384xbf16, #tpu.memory_space<vmem>>, vector<32x128xbf16>
    %cst_15 = arith.constant dense<0.000000e+00> : vector<8x128xf32>
    %36 = tpu.matmul %1, %35, %cst_15 {dimension_numbers = #tpu.dot_dimension_numbers<[1], [0], [0], [1], [0, 0, 1, 1], [], []>} : vector<8x32xbf16>, vector<32x128xbf16>, vector<8x128xf32> -> vector<8x128xf32>
    %c0_16 = arith.constant 0 : index
    %c256_17 = arith.constant 256 : index
    %37 = vector.load %arg3[%c0_16, %c256_17] : memref<1x384xf32, #tpu.memory_space<vmem>>, vector<1x128xf32>
    %38 = vector.broadcast %37 : vector<1x128xf32> to vector<8x128xf32>
    %39 = arith.addf %36, %38 : vector<8x128xf32>
    %cst_18 = arith.constant dense<0xFF800000> : vector<8xf32>
    %40 = vector.multi_reduction <maximumf>, %39, %cst_18 [1] : vector<8x128xf32> to vector<8xf32>
    %41 = vector.shape_cast %40 : vector<8xf32> to vector<8x1xf32>
    %42 = vector.broadcast %41 : vector<8x1xf32> to vector<8x128xf32>
    %43 = arith.subf %39, %42 : vector<8x128xf32>
    %44 = math.exp %43 : vector<8x128xf32>
    %cst_19 = arith.constant dense<0.000000e+00> : vector<8xf32>
    %45 = vector.multi_reduction <add>, %44, %cst_19 [1] : vector<8x128xf32> to vector<8xf32>
    %46 = vector.shape_cast %45 : vector<8xf32> to vector<8x1xf32>
    %47 = tpu.reciprocal %46 {approx = true} : vector<8x1xf32> -> vector<8x1xf32>
    %48 = vector.broadcast %47 : vector<8x1xf32> to vector<8x128xf32>
    %49 = arith.mulf %44, %48 : vector<8x128xf32>
    %50 = arith.addf %34, %49 : vector<8x128xf32>
    %c0_20 = arith.constant 0 : index
    %c0_21 = arith.constant 0 : index
    %51 = vector.load %arg4[%c0_20, %c0_21] : memref<8x128xf32, #tpu.memory_space<vmem>>, vector<8x128xf32>
    tpu.vector_store %arg4[%c0_20, %c0_21], %50 {strides = array<i32>} : memref<8x128xf32, #tpu.memory_space<vmem>>, vector<8x128xf32>,
    return
  }
  func.func @transform_0(%arg0: i32) -> (i32, i32) {
    %c0_i32 = arith.constant 0 : i32
    %c0_i32_0 = arith.constant 0 : i32
    return %arg0, %c0_i32 : i32, i32
  }
  func.func @transform_1(%arg0: i32) -> (i32, i32) {
    %c0_i32 = arith.constant 0 : i32
    %c0_i32_0 = arith.constant 0 : i32
    %c0_i32_1 = arith.constant 0 : i32
    return %c0_i32, %c0_i32_0 : i32, i32
  }
  func.func @transform_2(%arg0: i32) -> (i32, i32) {
    %c0_i32 = arith.constant 0 : i32
    %c0_i32_0 = arith.constant 0 : i32
    %c0_i32_1 = arith.constant 0 : i32
    return %c0_i32, %c0_i32_0 : i32, i32
  }
  func.func @transform_3(%arg0: i32) -> (i32, i32) {
    %c0_i32 = arith.constant 0 : i32
    %c0_i32_0 = arith.constant 0 : i32
    return %arg0, %c0_i32 : i32, i32
  }
}

</mosaic_0001>

<llo_original>
// kernel: tpu_custom_call.1
$region0: #{tpu_custom_call.1}
  #allocation0 [shape = 'u32[]', space=smem, size = 0x4, offset = 0x4, fixed_abs, tag = 'smem constant byte address 0x4 - core index']
  #allocation1 [shape = 'u32[144,128]{1,0:T(1,128)}', space=vmem, size = 0x12000, scoped, tag = 'internal scratch']
  %s0 = inlined_call_operand.hbm [shape: f32[8,32], index: 0, kind: input, shape index: {}]
  %s1 = inlined_call_operand.hbm [shape: bf16[32,384], index: 1, kind: input, shape index: {}]
  %s2 = inlined_call_operand.vmem [shape: f32[1,384], index: 2, kind: input, shape index: {}]
  %s3 = inlined_call_operand.hbm [shape: f32[8,128], index: 3, kind: output, shape index: {}]
  %s4 = sld [smem:[#allocation0]]
  $region30: #{tpu_custom_call.1} parent=0
    _
  %s6 = ssub.s32 1, %s4
  %s7 = scalar_select 0, %s6, %s4
  $region1: #{tpu_custom_call.1} parent=0
    #allocation2 [shape = 'u8[4096]{0}', space=vmem, size = 0x1000, scoped, tag = 'input window, operand 0, single buffered']
    #allocation3 [shape = 's32[1]{0}', space=sflag, size = 0x4, scoped, tag = 'scoped memory for tpu_custom_call.1']
    #allocation4 [shape = 's32[1]{0}', space=sflag, size = 0x4, scoped, tag = 'scoped memory for tpu_custom_call.1']
    #allocation5 [shape = 'u8[24576]{0}', space=vmem, size = 0x6000, scoped, tag = 'input window, operand 1, single buffered']
    #allocation6 [shape = 's32[1]{0}', space=sflag, size = 0x4, scoped, tag = 'scoped memory for tpu_custom_call.1']
    #allocation7 [shape = 'u8[4096]{0}', space=vmem, size = 0x1000, scoped, tag = 'output window, operand 0, single buffered']
    %8 = vsyncpa [#allocation3], 0
    %9 = vsyncpa [#allocation6], 0
    %10 = vsyncpa [#allocation4], 0
    // Predicated region
    $region2: #{tpu_custom_call.1} parent=1 // pred_check
      _
    $region3: #{tpu_custom_call.1} parent=1 // pred_check_branch
      %12 = sbr.rel (0) target = $region5
    $region4: #{tpu_custom_call.1} parent=1 // pred_region
      %s14 = ssub.s32 128, 128
      %15 = vsyncadd [#allocation3], %s14
      %s17 = sshll.u32 [#allocation2], 4
      %s18 = int_to_ptr.vmem [resolvable:$true] %s17
      %20 = dma.hbm_to_vmem [thread:$0]  %s0, 128, %s18, [#allocation3]
    $region5: #{tpu_custom_call.1} parent=1 // pred_fallthru
      _
    // Predicated region
    $region6: #{tpu_custom_call.1} parent=1 // pred_check
      _
    $region7: #{tpu_custom_call.1} parent=1 // pred_check_branch
      %22 = sbr.rel (0) target = $region9
    $region8: #{tpu_custom_call.1} parent=1 // pred_region
      %s24 = ssub.s32 768, 768
      %25 = vsyncadd [#allocation6], %s24
      %s26 = sshll.u32 [#allocation5], 4
      %s27 = int_to_ptr.vmem [resolvable:$true] %s26
      %32 = dma.hbm_to_vmem [thread:$0]  %s1, 768, %s27, [#allocation6], 192, 192, 12
    $region9: #{tpu_custom_call.1} parent=1 // pred_fallthru
      _
    // Predicated region
    $region10: #{tpu_custom_call.1} parent=1 // pred_check
      _
    $region11: #{tpu_custom_call.1} parent=1 // pred_check_branch
      %34 = sbr.rel (0) target = $region13
    $region12: #{tpu_custom_call.1} parent=1 // pred_region
      _
    $region13: #{tpu_custom_call.1} parent=1 // pred_fallthru
      _
    // Predicated region
    $region14: #{tpu_custom_call.1} parent=1 // pred_check
      _
    $region15: #{tpu_custom_call.1} parent=1 // pred_check_branch
      %36 = sbr.rel (0) target = $region17
    $region16: #{tpu_custom_call.1} parent=1 // pred_region
      %37 = dma.done [#allocation3], 128
    $region17: #{tpu_custom_call.1} parent=1 // pred_fallthru
      _
    // Predicated region
    $region18: #{tpu_custom_call.1} parent=1 // pred_check
      _
    $region19: #{tpu_custom_call.1} parent=1 // pred_check_branch
      %39 = sbr.rel (0) target = $region21
    $region20: #{tpu_custom_call.1} parent=1 // pred_region
      %40 = dma.done [#allocation6], 768
    $region21: #{tpu_custom_call.1} parent=1 // pred_fallthru
      _
    %v42 = vld [vmem:[#allocation2] sm:$0xff]
    %v43 = vpack.c.bf16 %v42, %v42
    %v44 = vld [vmem:[#allocation5] sm:$0xf]
    %v45 = vld [vmem:[#allocation5 + $0xc] sm:$0xf]
    %v46 = vld [vmem:[#allocation5 + $0x18] sm:$0xf]
    %v47 = vld [vmem:[#allocation5 + $0x24] sm:$0xf]
    %v48 = vld [vmem:[%s2] sm:$0x1]
    %v50 = vlaneseq
    %v51 = vshrl.u32 %v50, 7
    %v52 = vsub.s32 0, %v51
    %v53 = vrot.slane %v48, %v52
    %v59 = vunpack.c.l.b16 %v44
    %v60 = vunpack.c.l.b16 %v45
    %v61 = vunpack.c.l.b16 %v46
    %v62 = vunpack.c.l.b16 %v47
    %v63 = vpack.c.b16 %v60, %v59
    %v64 = vpack.c.b16 %v62, %v61
    %vm67 = vcmask 261120
    %v69 = vsel %vm67, %v43, 0
    %71 = vmatprep.subr.bf16.mxu0 0
    %72 = vmatpush1.bf16.msra.mxu0 %v63
    %73 = vmatprep.subr.bf16.mxu0 0
    %74 = vmatpush1.bf16.msra.mxu0 %v64
    %75 = vmatprep.subr.bf16.mxu0 0
    %76 = vmatpush1.bf16.msra.mxu0 0
    %77 = vmatprep.subr.bf16.mxu0 0
    %78 = vmatpush1.bf16.msra.mxu0 0
    %79 = vmatprep.subr.bf16.mxu0 0
    %80 = vmatpush1.bf16.msra.mxu0 0
    %81 = vmatprep.subr.bf16.mxu0 0
    %82 = vmatpush1.bf16.msra.mxu0 0
    %83 = vmatprep.subr.bf16.mxu0 0
    %84 = vmatpush1.bf16.msra.mxu0 0
    %85 = vmatprep.subr.bf16.mxu0 0
    %86 = vmatpush1.bf16.msra.mxu0 0
    %87 = vmatprep.subr.bf16.mxu0 0
    %88 = vmatpush1.bf16.msra.mxu0 0
    %89 = vmatprep.subr.bf16.mxu0 0
    %90 = vmatpush1.bf16.msra.mxu0 0
    %91 = vmatprep.subr.bf16.mxu0 0
    %92 = vmatpush1.bf16.msra.mxu0 0
    %93 = vmatprep.subr.bf16.mxu0 0
    %94 = vmatpush1.bf16.msra.mxu0 0
    %95 = vmatprep.subr.bf16.mxu0 0
    %96 = vmatpush1.bf16.msra.mxu0 0
    %97 = vmatprep.subr.bf16.mxu0 0
    %98 = vmatpush1.bf16.msra.mxu0 0
    %99 = vmatprep.subr.bf16.mxu0 0
    %100 = vmatpush1.bf16.msra.mxu0 0
    %101 = vmatprep.subr.bf16.mxu0 0
    %102 = vmatpush1.bf16.msra.mxu0 0
    %103 = vmatprep.mubr.bf16.mxu0 0
    %104 = vmatmul.mubr.bf16.gmra.mrb[0].mxu0 %v69
    %v105 = vpop.f32.mrb[0].mxu0
    %v106 = vadd.f32 %v53, %v105
    %v107 = vpop.f32.mrb[0].mxu0
    %v108 = vpop.f32.mrb[0].mxu0
    %v109 = vpop.f32.mrb[0].mxu0
    %110 = vdwg.mxu0
    %111 = vmax.xlane.f32.xlu0 %v106
    %v112 = vpop.xlane.xlu0 %111
    %v113 = vsub.f32 %v106, %v112
    %v114 = vmul.f32 %v113, 1.442695
    %v115 = vpow.pop %v114
    %116 = vadd.xlane.f32.xlu0 %v115
    %v117 = vpop.xlane.xlu0 %116
    %v118 = vrcp.pop %v117
    %v119 = vmul.f32 %v115, %v118
    %v120 = vadd.f32 %v119, 0.0
    %v121 = vld [vmem:[#allocation5 + $0x4] sm:$0xf]
    %v122 = vld [vmem:[#allocation5 + $0x10] sm:$0xf]
    %v123 = vld [vmem:[#allocation5 + $0x1c] sm:$0xf]
    %v124 = vld [vmem:[#allocation5 + $0x28] sm:$0xf]
    %v125 = vld [vmem:[%s2 + $0x1] sm:$0x1]
    %v127 = vlaneseq
    %v128 = vshrl.u32 %v127, 7
    %v129 = vsub.s32 0, %v128
    %v130 = vrot.slane %v125, %v129
    %v136 = vunpack.c.l.b16 %v121
    %v137 = vunpack.c.l.b16 %v122
    %v138 = vunpack.c.l.b16 %v123
    %v139 = vunpack.c.l.b16 %v124
    %v140 = vpack.c.b16 %v137, %v136
    %v141 = vpack.c.b16 %v139, %v138
    %144 = vmatprep.subr.bf16.mxu0 0
    %145 = vmatpush1.bf16.msra.mxu0 %v140
    %146 = vmatprep.subr.bf16.mxu0 0
    %147 = vmatpush1.bf16.msra.mxu0 %v141
    %148 = vmatprep.subr.bf16.mxu0 0
    %149 = vmatpush1.bf16.msra.mxu0 0
    %150 = vmatprep.subr.bf16.mxu0 0
    %151 = vmatpush1.bf16.msra.mxu0 0
    %152 = vmatprep.subr.bf16.mxu0 0
    %153 = vmatpush1.bf16.msra.mxu0 0
    %154 = vmatprep.subr.bf16.mxu0 0
    %155 = vmatpush1.bf16.msra.mxu0 0
    %156 = vmatprep.subr.bf16.mxu0 0
    %157 = vmatpush1.bf16.msra.mxu0 0
    %158 = vmatprep.subr.bf16.mxu0 0
    %159 = vmatpush1.bf16.msra.mxu0 0
    %160 = vmatprep.subr.bf16.mxu0 0
    %161 = vmatpush1.bf16.msra.mxu0 0
    %162 = vmatprep.subr.bf16.mxu0 0
    %163 = vmatpush1.bf16.msra.mxu0 0
    %164 = vmatprep.subr.bf16.mxu0 0
    %165 = vmatpush1.bf16.msra.mxu0 0
    %166 = vmatprep.subr.bf16.mxu0 0
    %167 = vmatpush1.bf16.msra.mxu0 0
    %168 = vmatprep.subr.bf16.mxu0 0
    %169 = vmatpush1.bf16.msra.mxu0 0
    %170 = vmatprep.subr.bf16.mxu0 0
    %171 = vmatpush1.bf16.msra.mxu0 0
    %172 = vmatprep.subr.bf16.mxu0 0
    %173 = vmatpush1.bf16.msra.mxu0 0
    %174 = vmatprep.subr.bf16.mxu0 0
    %175 = vmatpush1.bf16.msra.mxu0 0
    %176 = vmatprep.mubr.bf16.mxu0 0
    %177 = vmatmul.mubr.bf16.gmra.mrb[0].mxu0 %v69
    %v178 = vpop.f32.mrb[0].mxu0
    %v179 = vadd.f32 %v130, %v178
    %v180 = vpop.f32.mrb[0].mxu0
    %v181 = vpop.f32.mrb[0].mxu0
    %v182 = vpop.f32.mrb[0].mxu0
    %183 = vdwg.mxu0
    %184 = vmax.xlane.f32.xlu0 %v179
    %v185 = vpop.xlane.xlu0 %184
    %v186 = vsub.f32 %v179, %v185
    %v187 = vmul.f32 %v186, 1.442695
    %v188 = vpow.pop %v187
    %189 = vadd.xlane.f32.xlu0 %v188
    %v190 = vpop.xlane.xlu0 %189
    %v191 = vrcp.pop %v190
    %v192 = vmul.f32 %v188, %v191
    %v193 = vadd.f32 %v120, %v192
    %v194 = vld [vmem:[#allocation5 + $0x8] sm:$0xf]
    %v195 = vld [vmem:[#allocation5 + $0x14] sm:$0xf]
    %v196 = vld [vmem:[#allocation5 + $0x20] sm:$0xf]
    %v197 = vld [vmem:[#allocation5 + $0x2c] sm:$0xf]
    %v198 = vld [vmem:[%s2 + $0x2] sm:$0x1]
    %v200 = vlaneseq
    %v201 = vshrl.u32 %v200, 7
    %v202 = vsub.s32 0, %v201
    %v203 = vrot.slane %v198, %v202
    %v209 = vunpack.c.l.b16 %v194
    %v210 = vunpack.c.l.b16 %v195
    %v211 = vunpack.c.l.b16 %v196
    %v212 = vunpack.c.l.b16 %v197
    %v213 = vpack.c.b16 %v210, %v209
    %v214 = vpack.c.b16 %v212, %v211
    %217 = vmatprep.subr.bf16.mxu0 0
    %218 = vmatpush1.bf16.msra.mxu0 %v213
    %219 = vmatprep.subr.bf16.mxu0 0
    %220 = vmatpush1.bf16.msra.mxu0 %v214
    %221 = vmatprep.subr.bf16.mxu0 0
    %222 = vmatpush1.bf16.msra.mxu0 0
    %223 = vmatprep.subr.bf16.mxu0 0
    %224 = vmatpush1.bf16.msra.mxu0 0
    %225 = vmatprep.subr.bf16.mxu0 0
    %226 = vmatpush1.bf16.msra.mxu0 0
    %227 = vmatprep.subr.bf16.mxu0 0
    %228 = vmatpush1.bf16.msra.mxu0 0
    %229 = vmatprep.subr.bf16.mxu0 0
    %230 = vmatpush1.bf16.msra.mxu0 0
    %231 = vmatprep.subr.bf16.mxu0 0
    %232 = vmatpush1.bf16.msra.mxu0 0
    %233 = vmatprep.subr.bf16.mxu0 0
    %234 = vmatpush1.bf16.msra.mxu0 0
    %235 = vmatprep.subr.bf16.mxu0 0
    %236 = vmatpush1.bf16.msra.mxu0 0
    %237 = vmatprep.subr.bf16.mxu0 0
    %238 = vmatpush1.bf16.msra.mxu0 0
    %239 = vmatprep.subr.bf16.mxu0 0
    %240 = vmatpush1.bf16.msra.mxu0 0
    %241 = vmatprep.subr.bf16.mxu0 0
    %242 = vmatpush1.bf16.msra.mxu0 0
    %243 = vmatprep.subr.bf16.mxu0 0
    %244 = vmatpush1.bf16.msra.mxu0 0
    %245 = vmatprep.subr.bf16.mxu0 0
    %246 = vmatpush1.bf16.msra.mxu0 0
    %247 = vmatprep.subr.bf16.mxu0 0
    %248 = vmatpush1.bf16.msra.mxu0 0
    %249 = vmatprep.mubr.bf16.mxu0 0
    %250 = vmatmul.mubr.bf16.gmra.mrb[0].mxu0 %v69
    %v251 = vpop.f32.mrb[0].mxu0
    %v252 = vadd.f32 %v203, %v251
    %v253 = vpop.f32.mrb[0].mxu0
    %v254 = vpop.f32.mrb[0].mxu0
    %v255 = vpop.f32.mrb[0].mxu0
    %256 = vdwg.mxu0
    %257 = vmax.xlane.f32.xlu0 %v252
    %v258 = vpop.xlane.xlu0 %257
    %v259 = vsub.f32 %v252, %v258
    %v260 = vmul.f32 %v259, 1.442695
    %v261 = vpow.pop %v260
    %262 = vadd.xlane.f32.xlu0 %v261
    %v263 = vpop.xlane.xlu0 %262
    %v264 = vrcp.pop %v263
    %v265 = vmul.f32 %v261, %v264
    %v266 = vadd.f32 %v193, %v265
    %267 = vst [vmem:[#allocation7] sm:$0xff] %v266
    // Predicated region
    $region22: #{tpu_custom_call.1} parent=1 // pred_check
      _
    $region23: #{tpu_custom_call.1} parent=1 // pred_check_branch
      %269 = sbr.rel (0) target = $region25
    $region24: #{tpu_custom_call.1} parent=1 // pred_region
      %s271 = ssub.s32 128, 128
      %272 = vsyncadd [#allocation4], %s271
      %s274 = sshll.u32 [#allocation7], 4
      %s275 = int_to_ptr.vmem [resolvable:$true] %s274
      %277 = dma.vmem_to_hbm [thread:$0]  %s275, 128, %s3, [#allocation4]
    $region25: #{tpu_custom_call.1} parent=1 // pred_fallthru
      _
    // Predicated region
    $region26: #{tpu_custom_call.1} parent=1 // pred_check
      _
    $region27: #{tpu_custom_call.1} parent=1 // pred_check_branch
      %279 = sbr.rel (0) target = $region29
    $region28: #{tpu_custom_call.1} parent=1 // pred_region
      %280 = dma.done [#allocation4], 128
    $region29: #{tpu_custom_call.1} parent=1 // pred_fallthru
      _
    %281 = vsyncpa [#allocation3], 1
    %282 = vsyncpa [#allocation6], 1
    %283 = vsyncpa [#allocation4], 1

</llo_original>
